<compile_context>
chip_gen: v5e
topology: v5e:2x2
jax: 0.10.0
libtpu: 0.0.40
codegen_flags: <defaults>
</compile_context>

<pallas_src>
import functools

import jax
import jax.numpy as jnp
from jax.experimental import pallas as pl
from jax.experimental.pallas import tpu as pltpu


def _linear_project_kernel(x_ref, w_in_ref, b_in_ref, w_out_ref, b_out_ref, o_ref):
    # project_in:  h = x @ W_in + b_in   (W_in passed pre-transposed, (dim_in, dim_out))
    h = jnp.dot(x_ref[...], w_in_ref[...], preferred_element_type=jnp.float32)
    h += b_in_ref[...].astype(jnp.float32)
    # fn: elementwise GELU (tanh approximation -> EUP), computed in f32.
    h = jax.nn.gelu(h)
    # project_out: y = h @ W_out + b_out (W_out passed pre-transposed, (dim_out, dim_in))
    y = jnp.dot(h.astype(w_out_ref.dtype), w_out_ref[...],
                preferred_element_type=jnp.float32)
    y += b_out_ref[...].astype(jnp.float32)
    o_ref[...] = y.astype(o_ref.dtype)


def _identity_fn_kernel(x_ref, o_ref):
    # need_projection == False path: project_in/out are Identity, only fn runs.
    o_ref[...] = jax.nn.gelu(x_ref[...].astype(jnp.float32)).astype(o_ref.dtype)


def _round_up(x, m):
    return ((x + m - 1) // m) * m


@functools.partial(jax.jit, static_argnames=("dim_in", "dim_out", "compute_dtype"))
def linear_project(x, params, *, dim_in, dim_out, compute_dtype=jnp.bfloat16):
    """x: (B, S, dim_in) -> (B, S, dim_in), matching LinearProject.forward."""
    B, S, D = x.shape
    assert D == dim_in
    M = B * S

    # Row-tile size: 256 is MXU/pipeline friendly; shrink (multiple of 8) when
    # the whole problem is smaller than one tile.  Pad M so every tile is full
    # (lane-dense, unmasked stores; padded rows are sliced off afterwards).
    TM = min(256, _round_up(M, 8))
    M_pad = _round_up(M, TM)

    x2 = x.reshape(M, dim_in)
    if M_pad != M:
        x2 = jnp.pad(x2, ((0, M_pad - M), (0, 0)))
    grid = (M_pad // TM,)
    out_itemsize = jnp.dtype(x.dtype).itemsize

    if dim_in == dim_out:
        # Elementwise path is HBM-bandwidth bound: still tile M so DMA overlaps
        # compute and VMEM stays bounded.
        vmem_limit = min(int(1.5 * (4 * TM * dim_in * out_itemsize)) + (8 << 20),
                         128 << 20)
        out = pl.pallas_call(
            _identity_fn_kernel,
            out_shape=jax.ShapeDtypeStruct((M_pad, dim_in), x.dtype),
            grid_spec=pltpu.PrefetchScalarGridSpec(
                num_scalar_prefetch=0,
                grid=grid,
                in_specs=[pl.BlockSpec((TM, dim_in), lambda i: (i, 0))],
                out_specs=pl.BlockSpec((TM, dim_in), lambda i: (i, 0)),
            ),
            compiler_params=pltpu.CompilerParams(
                dimension_semantics=("parallel",),
                vmem_limit_bytes=vmem_limit),
        )(x2)
        return out[:M].reshape(B, S, dim_in)

    w_in_t, b_in, w_out_t, b_out = params  # (din,dout), (1,dout), (dout,din), (1,din)

    # Feed the MXU in compute_dtype (bf16 by default): ~2x MXU rate on v6e/v7x
    # and halved weight/activation DMA bytes.  Accumulation stays f32.
    c_dtype = jnp.dtype(compute_dtype)
    x2 = x2.astype(c_dtype)
    w_in_t = w_in_t.astype(c_dtype)
    b_in = b_in.astype(c_dtype)
    w_out_t = w_out_t.astype(c_dtype)
    b_out = b_out.astype(c_dtype)

    # VMEM budget: resident weights/biases (counted 2x, conservative), 2x
    # double-buffered x/out row tiles, the f32 (TM, dim_out) intermediate,
    # plus headroom for compiler scratch.
    csize = c_dtype.itemsize
    vmem_need = (
        2 * (dim_in * dim_out + dim_out * dim_in + dim_in + dim_out) * csize
        + 2 * TM * dim_in * csize
        + 2 * TM * dim_in * out_itemsize
        + TM * dim_out * 4)
    vmem_limit = min(int(1.25 * vmem_need) + (8 << 20), 128 << 20)

    out = pl.pallas_call(
        _linear_project_kernel,
        out_shape=jax.ShapeDtypeStruct((M_pad, dim_in), x.dtype),
        grid_spec=pltpu.PrefetchScalarGridSpec(
            num_scalar_prefetch=0,
            grid=grid,
            in_specs=[
                pl.BlockSpec((TM, dim_in), lambda i: (i, 0)),       # x row tile
                pl.BlockSpec((dim_in, dim_out), lambda i: (0, 0)),  # W_in (resident)
                pl.BlockSpec((1, dim_out), lambda i: (0, 0)),       # b_in (resident)
                pl.BlockSpec((dim_out, dim_in), lambda i: (0, 0)),  # W_out (resident)
                pl.BlockSpec((1, dim_in), lambda i: (0, 0)),        # b_out (resident)
            ],
            out_specs=pl.BlockSpec((TM, dim_in), lambda i: (i, 0)),
        ),
        compiler_params=pltpu.CompilerParams(
            dimension_semantics=("parallel",),
            vmem_limit_bytes=vmem_limit),
    )(x2, w_in_t, b_in, w_out_t, b_out)
    return out[:M].reshape(B, S, dim_in)


def init_params(key, dim_in, dim_out, dtype=jnp.float32):
    """Deterministic init mimicking nn.Linear shapes (stored pre-transposed)."""
    k1, k2, k3, k4 = jax.random.split(key, 4)
    bound_in = 1.0 / (dim_in ** 0.5)
    bound_out = 1.0 / (dim_out ** 0.5)
    # nn.Linear(dim_in, dim_out): weight (dim_out, dim_in) -> store transpose.
    w_in_t = jax.random.uniform(k1, (dim_in, dim_out), dtype, -bound_in, bound_in)
    b_in = jax.random.uniform(k2, (1, dim_out), dtype, -bound_in, bound_in)
    # nn.Linear(dim_out, dim_in): weight (dim_in, dim_out) -> store transpose.
    w_out_t = jax.random.uniform(k3, (dim_out, dim_in), dtype, -bound_out, bound_out)
    b_out = jax.random.uniform(k4, (1, dim_in), dtype, -bound_out, bound_out)
    return (w_in_t, b_in, w_out_t, b_out)


def _reference(x2, params, compute_dtype=None):
    """Pure-JAX reference on the flattened (M, dim_in) input."""
    w_in_t, b_in, w_out_t, b_out = params
    if compute_dtype is not None:
        x2 = x2.astype(compute_dtype)
        w_in_t = w_in_t.astype(compute_dtype)
        b_in = b_in.astype(compute_dtype)
        w_out_t = w_out_t.astype(compute_dtype)
        b_out = b_out.astype(compute_dtype)
    h = jnp.dot(x2, w_in_t, preferred_element_type=jnp.float32)
    h = h + b_in[0].astype(jnp.float32)
    h = jax.nn.gelu(h)
    y = jnp.dot(h.astype(w_out_t.dtype), w_out_t, preferred_element_type=jnp.float32)
    return y + b_out[0].astype(jnp.float32)


if __name__ == "__main__":
    B, S, dim_in, dim_out = 2, 8, 32, 64
    key = jax.random.PRNGKey(0)
    kx, kp = jax.random.split(key)
    x = jax.random.normal(kx, (B, S, dim_in), jnp.float32)
    params = init_params(kp, dim_in, dim_out)
    x2 = x.reshape(-1, dim_in)

    # 1) f32 compute path: tight check against the pure-f32 reference.
    y32 = linear_project(x, params, dim_in=dim_in, dim_out=dim_out,
                         compute_dtype=jnp.float32)
    y32 = jax.block_until_ready(y32)
    ref32 = _reference(x2, params).reshape(B, S, dim_in)
    assert y32.shape == (B, S, dim_in), y32.shape
    assert jnp.allclose(y32, ref32, atol=1e-4, rtol=1e-4), float(
        jnp.max(jnp.abs(y32 - ref32)))

    # 2) bf16 compute path (default perf config): check against a bf16 reference.
    y16 = linear_project(x, params, dim_in=dim_in, dim_out=dim_out)
    y16 = jax.block_until_ready(y16)
    ref16 = _reference(x2, params, jnp.bfloat16).reshape(B, S, dim_in).astype(x.dtype)
    assert jnp.allclose(y16, ref16, atol=2e-2, rtol=2e-2), float(
        jnp.max(jnp.abs(y16 - ref16)))

    # 3) identity path (dim_in == dim_out): only fn runs.
    yid = linear_project(x, None, dim_in=dim_in, dim_out=dim_in)
    yid = jax.block_until_ready(yid)
    assert jnp.allclose(yid, jax.nn.gelu(x), atol=1e-4, rtol=1e-4), float(
        jnp.max(jnp.abs(yid - jax.nn.gelu(x))))

    print("KERNEL_OK")
</pallas_src>

<mosaic_0001>
module attributes {stable_mosaic.version = 11 : i64} {
  func.func @_linear_project_kernel(%arg0: i32, %arg1: memref<16x32xf32, #tpu.memory_space<vmem>>, %arg2: memref<32x64xf32, #tpu.memory_space<vmem>>, %arg3: memref<1x64xf32, #tpu.memory_space<vmem>>, %arg4: memref<64x32xf32, #tpu.memory_space<vmem>>, %arg5: memref<1x32xf32, #tpu.memory_space<vmem>>, %arg6: memref<16x32xf32, #tpu.memory_space<vmem>>) attributes {dimension_semantics = [#tpu.dimension_semantics<parallel>], iteration_bounds = array<i64: 1>, scalar_prefetch = 0 : i64, scratch_operands = 0 : i64, tpu.core_type = #tpu.core_type<tc>, window_params = [{transform_indices = @transform_0, window_bounds = array<i64: 16, 32>}, {pipeline_mode = #tpu.pipeline_mode<synchronous>, transform_indices = @transform_1, window_bounds = array<i64: 32, 64>}, {pipeline_mode = #tpu.pipeline_mode<synchronous>, transform_indices = @transform_2, window_bounds = array<i64: 1, 64>}, {pipeline_mode = #tpu.pipeline_mode<synchronous>, transform_indices = @transform_3, window_bounds = array<i64: 64, 32>}, {pipeline_mode = #tpu.pipeline_mode<synchronous>, transform_indices = @transform_4, window_bounds = array<i64: 1, 32>}, {transform_indices = @transform_5, window_bounds = array<i64: 16, 32>}]} {
    %c0 = arith.constant 0 : index
    %c0_0 = arith.constant 0 : index
    %0 = vector.load %arg1[%c0, %c0_0] : memref<16x32xf32, #tpu.memory_space<vmem>>, vector<16x32xf32>
    %c0_1 = arith.constant 0 : index
    %c0_2 = arith.constant 0 : index
    %1 = vector.load %arg2[%c0_1, %c0_2] : memref<32x64xf32, #tpu.memory_space<vmem>>, vector<32x64xf32>
    %cst = arith.constant dense<0.000000e+00> : vector<16x64xf32>
    %2 = tpu.matmul %0, %1, %cst {dimension_numbers = #tpu.dot_dimension_numbers<[1], [0], [0], [1], [0, 0, 1, 1], [], []>} : vector<16x32xf32>, vector<32x64xf32>, vector<16x64xf32> -> vector<16x64xf32>
    %c0_3 = arith.constant 0 : index
    %c0_4 = arith.constant 0 : index
    %3 = vector.load %arg3[%c0_3, %c0_4] : memref<1x64xf32, #tpu.memory_space<vmem>>, vector<1x64xf32>
    %4 = vector.broadcast %3 : vector<1x64xf32> to vector<16x64xf32>
    %5 = arith.addf %2, %4 : vector<16x64xf32>
    %6 = arith.mulf %5, %5 : vector<16x64xf32>
    %7 = arith.mulf %5, %6 : vector<16x64xf32>
    %cst_5 = arith.constant 4.471500e-02 : f32
    %8 = vector.broadcast %cst_5 : f32 to vector<16x64xf32>
    %9 = arith.mulf %8, %7 : vector<16x64xf32>
    %10 = arith.addf %5, %9 : vector<16x64xf32>
    %cst_6 = arith.constant 0.797884583 : f32
    %11 = vector.broadcast %cst_6 : f32 to vector<16x64xf32>
    %12 = arith.mulf %11, %10 : vector<16x64xf32>
    %13 = math.tanh %12 : vector<16x64xf32>
    %cst_7 = arith.constant 1.000000e+00 : f32
    %14 = vector.broadcast %cst_7 : f32 to vector<16x64xf32>
    %15 = arith.addf %14, %13 : vector<16x64xf32>
    %cst_8 = arith.constant 5.000000e-01 : f32
    %16 = vector.broadcast %cst_8 : f32 to vector<16x64xf32>
    %17 = arith.mulf %16, %15 : vector<16x64xf32>
    %18 = arith.mulf %5, %17 : vector<16x64xf32>
    %c0_9 = arith.constant 0 : index
    %c0_10 = arith.constant 0 : index
    %19 = vector.load %arg4[%c0_9, %c0_10] : memref<64x32xf32, #tpu.memory_space<vmem>>, vector<64x32xf32>
    %cst_11 = arith.constant dense<0.000000e+00> : vector<16x32xf32>
    %20 = tpu.matmul %18, %19, %cst_11 {dimension_numbers = #tpu.dot_dimension_numbers<[1], [0], [0], [1], [0, 0, 1, 1], [], []>} : vector<16x64xf32>, vector<64x32xf32>, vector<16x32xf32> -> vector<16x32xf32>
    %c0_12 = arith.constant 0 : index
    %c0_13 = arith.constant 0 : index
    %21 = vector.load %arg5[%c0_12, %c0_13] : memref<1x32xf32, #tpu.memory_space<vmem>>, vector<1x32xf32>
    %22 = vector.broadcast %21 : vector<1x32xf32> to vector<16x32xf32>
    %23 = arith.addf %20, %22 : vector<16x32xf32>
    %c0_14 = arith.constant 0 : index
    %c0_15 = arith.constant 0 : index
    %24 = vector.load %arg6[%c0_14, %c0_15] : memref<16x32xf32, #tpu.memory_space<vmem>>, vector<16x32xf32>
    tpu.vector_store %arg6[%c0_14, %c0_15], %23 {strides = array<i32>} : memref<16x32xf32, #tpu.memory_space<vmem>>, vector<16x32xf32>,
    return
  }
  func.func @transform_0(%arg0: i32) -> (i32, i32) {
    %c0_i32 = arith.constant 0 : i32
    %c0_i32_0 = arith.constant 0 : i32
    return %arg0, %c0_i32 : i32, i32
  }
  func.func @transform_1(%arg0: i32) -> (i32, i32) {
    %c0_i32 = arith.constant 0 : i32
    %c0_i32_0 = arith.constant 0 : i32
    %c0_i32_1 = arith.constant 0 : i32
    return %c0_i32, %c0_i32_0 : i32, i32
  }
  func.func @transform_2(%arg0: i32) -> (i32, i32) {
    %c0_i32 = arith.constant 0 : i32
    %c0_i32_0 = arith.constant 0 : i32
    %c0_i32_1 = arith.constant 0 : i32
    return %c0_i32, %c0_i32_0 : i32, i32
  }
  func.func @transform_3(%arg0: i32) -> (i32, i32) {
    %c0_i32 = arith.constant 0 : i32
    %c0_i32_0 = arith.constant 0 : i32
    %c0_i32_1 = arith.constant 0 : i32
    return %c0_i32, %c0_i32_0 : i32, i32
  }
  func.func @transform_4(%arg0: i32) -> (i32, i32) {
    %c0_i32 = arith.constant 0 : i32
    %c0_i32_0 = arith.constant 0 : i32
    %c0_i32_1 = arith.constant 0 : i32
    return %c0_i32, %c0_i32_0 : i32, i32
  }
  func.func @transform_5(%arg0: i32) -> (i32, i32) {
    %c0_i32 = arith.constant 0 : i32
    %c0_i32_0 = arith.constant 0 : i32
    return %arg0, %c0_i32 : i32, i32
  }
}

</mosaic_0001>

<llo_original>
// kernel: linear_project.1
$region0: #{linear_project.1}
  #allocation0 [shape = 'u32[]', space=smem, size = 0x4, offset = 0x4, fixed_abs, tag = 'smem constant byte address 0x4 - core index']
  #allocation1 [shape = 'u32[72,128]{1,0:T(1,128)}', space=vmem, size = 0x9000, scoped, tag = 'internal scratch']
  %s0 = inlined_call_operand.vmem [shape: f32[16,32], index: 0, kind: input, shape index: {}]
  %s1 = inlined_call_operand.vmem [shape: f32[32,64], index: 1, kind: input, shape index: {}]
  %s2 = inlined_call_operand.vmem [shape: f32[1,64], index: 2, kind: input, shape index: {}]
  %s3 = inlined_call_operand.vmem [shape: f32[64,32], index: 3, kind: input, shape index: {}]
  %s4 = inlined_call_operand.vmem [shape: f32[1,32], index: 4, kind: input, shape index: {}]
  %s5 = inlined_call_operand.hbm [shape: f32[16,32], index: 5, kind: output, shape index: {}]
  %s6 = sld [smem:[#allocation0]]
  $region30: #{linear_project.1} parent=0
    _
  %s8 = ssub.s32 1, %s6
  %s9 = scalar_select 0, %s8, %s6
  $region1: #{linear_project.1} parent=0
    #allocation2 [shape = 'u8[8192]{0}', space=vmem, size = 0x2000, scoped, tag = 'output window, operand 0, single buffered']
    #allocation3 [shape = 's32[1]{0}', space=sflag, size = 0x4, scoped, tag = 'scoped memory for linear_project.1']
    %10 = vsyncpa [#allocation3], 0
    // Predicated region
    $region2: #{linear_project.1} parent=1 // pred_check
      _
    $region3: #{linear_project.1} parent=1 // pred_check_branch
      %12 = sbr.rel (0) target = $region5
    $region4: #{linear_project.1} parent=1 // pred_region
      _
    $region5: #{linear_project.1} parent=1 // pred_fallthru
      _
    // Predicated region
    $region6: #{linear_project.1} parent=1 // pred_check
      _
    $region7: #{linear_project.1} parent=1 // pred_check_branch
      %14 = sbr.rel (0) target = $region9
    $region8: #{linear_project.1} parent=1 // pred_region
      _
    $region9: #{linear_project.1} parent=1 // pred_fallthru
      _
    // Predicated region
    $region10: #{linear_project.1} parent=1 // pred_check
      _
    $region11: #{linear_project.1} parent=1 // pred_check_branch
      %16 = sbr.rel (0) target = $region13
    $region12: #{linear_project.1} parent=1 // pred_region
      _
    $region13: #{linear_project.1} parent=1 // pred_fallthru
      _
    // Predicated region
    $region14: #{linear_project.1} parent=1 // pred_check
      _
    $region15: #{linear_project.1} parent=1 // pred_check_branch
      %18 = sbr.rel (0) target = $region17
    $region16: #{linear_project.1} parent=1 // pred_region
      _
    $region17: #{linear_project.1} parent=1 // pred_fallthru
      _
    // Predicated region
    $region18: #{linear_project.1} parent=1 // pred_check
      _
    $region19: #{linear_project.1} parent=1 // pred_check_branch
      %20 = sbr.rel (0) target = $region21
    $region20: #{linear_project.1} parent=1 // pred_region
      _
    $region21: #{linear_project.1} parent=1 // pred_fallthru
      _
    %v21 = vld [vmem:[%s0] sm:$0xff]
    %v22 = vld [vmem:[%s0 + $0x8] sm:$0xff]
    %v23 = vld [vmem:[%s1] sm:$0xff]
    %v24 = vld [vmem:[%s1 + $0x8] sm:$0xff]
    %v25 = vld [vmem:[%s1 + $0x10] sm:$0xff]
    %v26 = vld [vmem:[%s1 + $0x18] sm:$0xff]
    %v27 = vld [vmem:[%s2] sm:$0x1]
    %v29 = vperm.slane %v27, 0
    %vm31 = vcmask 261120
    %v33 = vsel %vm31, %v21, 0
    %v36 = vsel %vm31, %v22, 0
    %38 = vmatpush.msra.mxu0 0.0
    %39 = vmatpush.msra.mxu0 0.0
    %40 = vmatpush.msra.mxu0 0.0
    %41 = vmatpush.msra.mxu0 0.0
    %42 = vmatpush.msra.mxu0 0.0
    %43 = vmatpush.msra.mxu0 0.0
    %44 = vmatpush.msra.mxu0 0.0
    %45 = vmatpush.msra.mxu0 0.0
    %46 = vmatpush.msra.mxu0 0.0
    %47 = vmatpush.msra.mxu0 0.0
    %48 = vmatpush.msra.mxu0 0.0
    %49 = vmatpush.msra.mxu0 0.0
    %50 = vmatpush.msra.mxu0 %v26
    %51 = vmatpush.msra.mxu0 %v25
    %52 = vmatpush.msra.mxu0 %v24
    %53 = vmatpush.msra.mxu0 %v23
    %54 = vmatmul.f32.gmra.mxu0 %v33
    %v55 = vpop.f32.mrf.mxu0
    %v56 = vadd.f32 %v29, %v55
    %57 = vmatmul.f32.gmra.mxu0 %v36
    %v58 = vpop.f32.mrf.mxu0
    %v59 = vadd.f32 %v29, %v58
    %60 = vdwg.mxu0
    %v61 = vmul.f32 %v56, %v56
    %v62 = vmul.f32 %v59, %v59
    %v63 = vmul.f32 %v56, %v61
    %v64 = vmul.f32 %v59, %v62
    %v65 = vmul.f32 %v63, 0.044715
    %v66 = vmul.f32 %v64, 0.044715
    %v67 = vadd.f32 %v56, %v65
    %v68 = vadd.f32 %v59, %v66
    %v69 = vmul.f32 %v67, 0.7978846
    %v70 = vmul.f32 %v68, 0.7978846
    %v71 = vtanh.pop %v69
    %v72 = vtanh.pop %v70
    %v73 = vadd.f32 %v71, 1.0
    %v74 = vadd.f32 %v72, 1.0
    %v75 = vmul.f32 %v73, 0.5
    %v76 = vmul.f32 %v74, 0.5
    %v77 = vmul.f32 %v56, %v75
    %v78 = vmul.f32 %v59, %v76
    %v79 = vld [vmem:[%s3] sm:$0xff]
    %v80 = vld [vmem:[%s3 + $0x8] sm:$0xff]
    %v81 = vld [vmem:[%s3 + $0x10] sm:$0xff]
    %v82 = vld [vmem:[%s3 + $0x18] sm:$0xff]
    %v83 = vld [vmem:[%s3 + $0x20] sm:$0xff]
    %v84 = vld [vmem:[%s3 + $0x28] sm:$0xff]
    %v85 = vld [vmem:[%s3 + $0x30] sm:$0xff]
    %v86 = vld [vmem:[%s3 + $0x38] sm:$0xff]
    %v87 = vld [vmem:[%s4] sm:$0x1]
    %v89 = vperm.slane %v87, 0
    %vm91 = vcmask 523264
    %v93 = vsel %vm91, %v77, 0
    %v96 = vsel %vm91, %v78, 0
    %98 = vmatpush.msra.mxu0 0.0
    %99 = vmatpush.msra.mxu0 0.0
    %100 = vmatpush.msra.mxu0 0.0
    %101 = vmatpush.msra.mxu0 0.0
    %102 = vmatpush.msra.mxu0 0.0
    %103 = vmatpush.msra.mxu0 0.0
    %104 = vmatpush.msra.mxu0 0.0
    %105 = vmatpush.msra.mxu0 0.0
    %106 = vmatpush.msra.mxu0 %v86
    %107 = vmatpush.msra.mxu0 %v85
    %108 = vmatpush.msra.mxu0 %v84
    %109 = vmatpush.msra.mxu0 %v83
    %110 = vmatpush.msra.mxu0 %v82
    %111 = vmatpush.msra.mxu0 %v81
    %112 = vmatpush.msra.mxu0 %v80
    %113 = vmatpush.msra.mxu0 %v79
    %114 = vmatmul.f32.gmra.mxu0 %v93
    %v115 = vpop.f32.mrf.mxu0
    %v116 = vadd.f32 %v89, %v115
    %117 = vmatmul.f32.gmra.mxu0 %v96
    %v118 = vpop.f32.mrf.mxu0
    %v119 = vadd.f32 %v89, %v118
    %120 = vdwg.mxu0
    %121 = vst.msk [vmem:[#allocation2] sm:$0xff] %vm31, %v116
    %122 = vst.msk [vmem:[#allocation2 + $0x8] sm:$0xff] %vm31, %v119
    // Predicated region
    $region22: #{linear_project.1} parent=1 // pred_check
      _
    $region23: #{linear_project.1} parent=1 // pred_check_branch
      %124 = sbr.rel (0) target = $region25
    $region24: #{linear_project.1} parent=1 // pred_region
      %126 = vsyncadd [#allocation3], 0
      %s127 = sshll.u32 [#allocation2], 4
      %s128 = int_to_ptr.vmem [resolvable:$true] %s127
      %s129 = sshll.u32 %s5, 4
      %s130 = int_to_ptr.hbm [resolvable:$true] %s129
      %135 = dma.vmem_to_hbm [thread:$0]  %s128, 256, %s130, [#allocation3], 128, 128, 8
    $region25: #{linear_project.1} parent=1 // pred_fallthru
      _
    // Predicated region
    $region26: #{linear_project.1} parent=1 // pred_check
      _
    $region27: #{linear_project.1} parent=1 // pred_check_branch
      %137 = sbr.rel (0) target = $region29
    $region28: #{linear_project.1} parent=1 // pred_region
      %139 = dma.done [#allocation3], 256
    $region29: #{linear_project.1} parent=1 // pred_fallthru
      _
    %140 = vsyncpa [#allocation3], 1

</llo_original>
